<compile_context>
chip_gen: v7x
topology: tpu7x:2x2x1
jax: 0.10.0
libtpu: 0.0.40
codegen_flags: <defaults>
</compile_context>

<pallas_src>
import math

import jax
import jax.numpy as jnp
import numpy as np
from jax.experimental import pallas as pl
from jax.experimental.pallas import tpu as pltpu

_TWO_PI = 2.0 * math.pi
_EPS = 1e-6
_TEMPERATURE = 10000.0
_LANE = 128
_MAX_BLOCK_HW = 32768            # hard cap on lanes per grid step
_OUT_VMEM_BUDGET = 4 * 1024 * 1024   # bytes per output buffer (double-buffered)
_SPLIT_THRESHOLD = 8192          # lanes above which we force >=2 grid steps (v7x)


def _sinusoid_kernel(pos_ref, const_ref, o_ref):
    """One lane-dense (2, D, block_hw) tile of the sinusoidal embedding.

    pos_ref  : (2, block_hw)  row 0 = normalized y positions, row 1 = x,
               both in (0, 2*pi].
    const_ref: (2, D, 1)      [0] = reciprocal inverse-frequency column,
               [1] = phase column (pi/2 on odd channels -> cos via sin).
    o_ref    : (2, D, block_hw)  [0] = y-embedding channels, [1] = x-embedding.
    """
    recip = const_ref[0]          # (D, 1)
    phase = const_ref[1]          # (D, 1)
    y = pos_ref[0:1, :]           # (1, block_hw)
    x = pos_ref[1:2, :]           # (1, block_hw)
    o_ref[0] = jnp.sin(y * recip + phase)   # y half: 1 mul + 1 add + sin
    o_ref[1] = jnp.sin(x * recip + phase)   # x half: 1 mul + 1 add + sin


def _build_embedding(H: int, W: int, D: int) -> jax.Array:
    """Compute the (1, 2*D, H, W) embedding with a Pallas kernel."""
    C = 2 * D
    HW = H * W

    # ---- block / grid sizing --------------------------------------------
    hw_lanes = pl.cdiv(HW, _LANE) * _LANE
    budget_cap = max(
        _LANE,
        min(_MAX_BLOCK_HW, (_OUT_VMEM_BUDGET // (C * 4)) // _LANE * _LANE),
    )

    if hw_lanes <= budget_cap and hw_lanes <= _SPLIT_THRESHOLD:
        # Single full-extent block: exempt from the 128-lane rule, so no lane
        # padding and no post-kernel slice even when H*W is not lane-aligned.
        block_hw = HW
        hw_pad = HW
        grid = (1,)
    else:
        # Gridded: large VMEM-budget-driven blocks, and always >= 2 steps so
        # the "parallel" axis can shard across v7x's two TensorCores.
        block_hw = min(budget_cap, pl.cdiv(pl.cdiv(hw_lanes, 2), _LANE) * _LANE)
        hw_pad = pl.cdiv(HW, block_hw) * block_hw
        grid = (hw_pad // block_hw,)

    # ---- trace-time constants (numpy; H, W, D are static Python ints) ----
    flat = np.arange(hw_pad, dtype=np.int64)
    row = flat // W
    col = flat % W
    # Padding lanes (if any) get arbitrary finite values; sliced off below.
    y_norm = ((row + 1).astype(np.float64) / (H + _EPS) * _TWO_PI).astype(np.float32)
    x_norm = ((col + 1).astype(np.float64) / (W + _EPS) * _TWO_PI).astype(np.float32)
    pos = np.stack([y_norm, x_norm], axis=0)                       # (2, hw_pad)

    d_idx = np.arange(D)
    inv_freq = np.power(float(_TEMPERATURE), 2.0 * (d_idx // 2) / float(D))
    recip = (1.0 / inv_freq).astype(np.float32)                    # (D,)
    phase = np.where((d_idx % 2) == 1,
                     np.float32(math.pi / 2.0),
                     np.float32(0.0)).astype(np.float32)           # (D,)
    const = np.stack([recip, phase], axis=0).reshape(2, D, 1)      # (2, D, 1)

    pos_j = jnp.asarray(pos)
    const_j = jnp.asarray(const)

    cost = pl.CostEstimate(
        flops=2 * C * HW,                 # 1 mul + 1 add per output element
        transcendentals=C * HW,           # one sin per output element
        bytes_accessed=(C * HW + 2 * HW + 2 * D) * 4,
    )

    out = pl.pallas_call(
        _sinusoid_kernel,
        out_shape=jax.ShapeDtypeStruct((2, D, hw_pad), jnp.float32),
        grid_spec=pltpu.PrefetchScalarGridSpec(
            num_scalar_prefetch=0,
            grid=grid,
            in_specs=[
                pl.BlockSpec((2, block_hw), lambda i: (0, i)),     # positions
                pl.BlockSpec((2, D, 1), lambda i: (0, 0, 0)),      # constants
            ],
            out_specs=pl.BlockSpec((2, D, block_hw), lambda i: (0, 0, i)),
        ),
        compiler_params=pltpu.CompilerParams(
            dimension_semantics=("parallel",)),
        cost_estimate=cost,
    )(pos_j, const_j)

    if hw_pad != HW:
        out = out[:, :, :HW]
    # (2, D, HW) -> (1, 2D, H, W): row-major merge of {y,x} x channel, then
    # row-major spatial unflatten -- no transpose needed.
    return out.reshape(1, C, H, W)


def _is_tracer(v) -> bool:
    try:
        return isinstance(v, jax.core.Tracer)
    except AttributeError:  # pragma: no cover - very old/new jax.core layouts
        return False


_EMBED_CACHE: dict = {}


def act_sinusoidal_position_embedding_2d(x: jax.Array, dimension: int) -> jax.Array:
    """Pallas equivalent of ACTSinusoidalPositionEmbedding2d.forward.

    Args:
        x: (B, C, H, W) feature map (only its static spatial shape is used).
        dimension: per-axis embedding dimension D.
    Returns:
        (1, 2*D, H, W) float32 positional embedding.
    """
    _, _, H, W = x.shape
    key = (int(H), int(W), int(dimension))
    emb = _EMBED_CACHE.get(key)
    if emb is None:
        emb = _build_embedding(int(H), int(W), int(dimension))
        if not _is_tracer(emb):      # don't cache traced values under jit
            _EMBED_CACHE[key] = emb
    return emb


def _reference_jax(x: jax.Array, dimension: int) -> jax.Array:
    """Pure-JAX port of the PyTorch forward, for correctness checking."""
    _, _, H, W = x.shape
    not_mask = jnp.ones((1, H, W), jnp.float32)
    y_range = jnp.cumsum(not_mask, axis=1)
    x_range = jnp.cumsum(not_mask, axis=2)
    y_range = y_range / (y_range[:, -1:, :] + _EPS) * _TWO_PI
    x_range = x_range / (x_range[:, :, -1:] + _EPS) * _TWO_PI
    inv_freq = _TEMPERATURE ** (
        2 * (jnp.arange(dimension, dtype=jnp.float32) // 2) / dimension
    )
    x_r = x_range[..., None] / inv_freq
    y_r = y_range[..., None] / inv_freq
    pe_x = jnp.stack((jnp.sin(x_r[..., 0::2]), jnp.cos(x_r[..., 1::2])), axis=-1)
    pe_x = pe_x.reshape(*pe_x.shape[:3], -1)
    pe_y = jnp.stack((jnp.sin(y_r[..., 0::2]), jnp.cos(y_r[..., 1::2])), axis=-1)
    pe_y = pe_y.reshape(*pe_y.shape[:3], -1)
    pos = jnp.concatenate((pe_y, pe_x), axis=3)
    return jnp.transpose(pos, (0, 3, 1, 2))


if __name__ == "__main__":
    # Small shapes consistent with the module: (B, C, H, W) feature map,
    # per-axis embedding dimension D=16 -> output (1, 32, 16, 16).
    key = jax.random.PRNGKey(0)
    x = jax.random.normal(key, (2, 4, 16, 16), dtype=jnp.float32)
    dimension = 16

    out = act_sinusoidal_position_embedding_2d(x, dimension)
    out = jax.block_until_ready(out)

    ref = jax.block_until_ready(_reference_jax(x, dimension))

    assert out.shape == (1, 2 * dimension, 16, 16), out.shape
    assert out.dtype == jnp.float32
    assert jnp.allclose(out, ref, atol=1e-5, rtol=1e-5), (
        float(jnp.max(jnp.abs(out - ref)))
    )
    print("KERNEL_OK")
</pallas_src>

<mosaic_0001>
module attributes {stable_mosaic.version = 11 : i64} {
  func.func @_sinusoid_kernel(%arg0: i32, %arg1: memref<2x256xf32, #tpu.memory_space<vmem>>, %arg2: memref<2x16x1xf32, #tpu.memory_space<vmem>>, %arg3: memref<2x16x256xf32, #tpu.memory_space<vmem>>) attributes {dimension_semantics = [#tpu.dimension_semantics<parallel>], iteration_bounds = array<i64: 1>, scalar_prefetch = 0 : i64, scratch_operands = 0 : i64, tpu.core_type = #tpu.core_type<tc>, window_params = [{transform_indices = @transform_0, window_bounds = array<i64: 2, 256>}, {pipeline_mode = #tpu.pipeline_mode<synchronous>, transform_indices = @transform_1, window_bounds = array<i64: 2, 16, 1>}, {transform_indices = @transform_2, window_bounds = array<i64: 2, 16, 256>}]} {
    %c0 = arith.constant 0 : index
    %c0_0 = arith.constant 0 : index
    %c0_1 = arith.constant 0 : index
    %0 = vector.load %arg2[%c0, %c0_0, %c0_1] : memref<2x16x1xf32, #tpu.memory_space<vmem>>, vector<1x16x1xf32>
    %1 = vector.shape_cast %0 : vector<1x16x1xf32> to vector<16x1xf32>
    %c1 = arith.constant 1 : index
    %c0_2 = arith.constant 0 : index
    %c0_3 = arith.constant 0 : index
    %2 = vector.load %arg2[%c1, %c0_2, %c0_3] : memref<2x16x1xf32, #tpu.memory_space<vmem>>, vector<1x16x1xf32>
    %3 = vector.shape_cast %2 : vector<1x16x1xf32> to vector<16x1xf32>
    %c0_4 = arith.constant 0 : index
    %c0_5 = arith.constant 0 : index
    %4 = vector.load %arg1[%c0_4, %c0_5] : memref<2x256xf32, #tpu.memory_space<vmem>>, vector<1x256xf32>
    %c1_6 = arith.constant 1 : index
    %c0_7 = arith.constant 0 : index
    %5 = vector.load %arg1[%c1_6, %c0_7] : memref<2x256xf32, #tpu.memory_space<vmem>>, vector<1x256xf32>
    %6 = vector.broadcast %4 : vector<1x256xf32> to vector<16x256xf32>
    %7 = vector.broadcast %1 : vector<16x1xf32> to vector<16x256xf32>
    %8 = arith.mulf %6, %7 : vector<16x256xf32>
    %9 = vector.broadcast %3 : vector<16x1xf32> to vector<16x256xf32>
    %10 = arith.addf %8, %9 : vector<16x256xf32>
    %11 = math.sin %10 : vector<16x256xf32>
    %c0_8 = arith.constant 0 : index
    %c0_9 = arith.constant 0 : index
    %c0_10 = arith.constant 0 : index
    %12 = vector.load %arg3[%c0_8, %c0_9, %c0_10] : memref<2x16x256xf32, #tpu.memory_space<vmem>>, vector<1x16x256xf32>
    %13 = vector.shape_cast %12 : vector<1x16x256xf32> to vector<16x256xf32>
    %14 = vector.shape_cast %11 : vector<16x256xf32> to vector<1x16x256xf32>
    tpu.vector_store %arg3[%c0_8, %c0_9, %c0_10], %14 {strides = array<i32>} : memref<2x16x256xf32, #tpu.memory_space<vmem>>, vector<1x16x256xf32>,
    %15 = vector.broadcast %5 : vector<1x256xf32> to vector<16x256xf32>
    %16 = vector.broadcast %1 : vector<16x1xf32> to vector<16x256xf32>
    %17 = arith.mulf %15, %16 : vector<16x256xf32>
    %18 = vector.broadcast %3 : vector<16x1xf32> to vector<16x256xf32>
    %19 = arith.addf %17, %18 : vector<16x256xf32>
    %20 = math.sin %19 : vector<16x256xf32>
    %c1_11 = arith.constant 1 : index
    %c0_12 = arith.constant 0 : index
    %c0_13 = arith.constant 0 : index
    %21 = vector.load %arg3[%c1_11, %c0_12, %c0_13] : memref<2x16x256xf32, #tpu.memory_space<vmem>>, vector<1x16x256xf32>
    %22 = vector.shape_cast %21 : vector<1x16x256xf32> to vector<16x256xf32>
    %23 = vector.shape_cast %20 : vector<16x256xf32> to vector<1x16x256xf32>
    tpu.vector_store %arg3[%c1_11, %c0_12, %c0_13], %23 {strides = array<i32>} : memref<2x16x256xf32, #tpu.memory_space<vmem>>, vector<1x16x256xf32>,
    return
  }
  func.func @transform_0(%arg0: i32) -> (i32, i32) {
    %c0_i32 = arith.constant 0 : i32
    %c0_i32_0 = arith.constant 0 : i32
    return %c0_i32, %arg0 : i32, i32
  }
  func.func @transform_1(%arg0: i32) -> (i32, i32, i32) {
    %c0_i32 = arith.constant 0 : i32
    %c0_i32_0 = arith.constant 0 : i32
    %c0_i32_1 = arith.constant 0 : i32
    %c0_i32_2 = arith.constant 0 : i32
    return %c0_i32, %c0_i32_0, %c0_i32_1 : i32, i32, i32
  }
  func.func @transform_2(%arg0: i32) -> (i32, i32, i32) {
    %c0_i32 = arith.constant 0 : i32
    %c0_i32_0 = arith.constant 0 : i32
    %c0_i32_1 = arith.constant 0 : i32
    return %c0_i32, %c0_i32_0, %arg0 : i32, i32, i32
  }
}

</mosaic_0001>

<llo_original>
// kernel: tpu_custom_call.1
$region0: #{tpu_custom_call.1}
  #allocation0 [shape = 'u32[]', space=smem, size = 0x4, offset = 0x4, fixed_abs, tag = 'smem constant byte address 0x4 - core index']
  #allocation1 [shape = 'u32[144,128]{1,0:T(1,128)}', space=vmem, size = 0x12000, scoped, tag = 'internal scratch']
  %s0 = inlined_call_operand.vmem [shape: f32[2,256], index: 0, kind: input, shape index: {}]
  %s1 = inlined_call_operand.vmem [shape: f32[2,16,1], index: 1, kind: input, shape index: {}]
  %s2 = inlined_call_operand.hbm [shape: f32[2,16,256], index: 2, kind: output, shape index: {}]
  %s3 = sld [smem:[#allocation0]]
  $region18: #{tpu_custom_call.1} parent=0
    _
  %s5 = ssub.s32 1, %s3
  %s6 = scalar_select 0, %s5, %s3
  $region1: #{tpu_custom_call.1} parent=0
    #allocation2 [shape = 'u8[32768]{0}', space=vmem, size = 0x8000, scoped, tag = 'output window, operand 0, single buffered']
    #allocation3 [shape = 's32[1]{0}', space=sflag, size = 0x4, scoped, tag = 'scoped memory for tpu_custom_call.1']
    %7 = vsyncpa [#allocation3], 0
    // Predicated region
    $region2: #{tpu_custom_call.1} parent=1 // pred_check
      _
    $region3: #{tpu_custom_call.1} parent=1 // pred_check_branch
      %9 = sbr.rel (0) target = $region5
    $region4: #{tpu_custom_call.1} parent=1 // pred_region
      _
    $region5: #{tpu_custom_call.1} parent=1 // pred_fallthru
      _
    // Predicated region
    $region6: #{tpu_custom_call.1} parent=1 // pred_check
      _
    $region7: #{tpu_custom_call.1} parent=1 // pred_check_branch
      %11 = sbr.rel (0) target = $region9
    $region8: #{tpu_custom_call.1} parent=1 // pred_region
      _
    $region9: #{tpu_custom_call.1} parent=1 // pred_fallthru
      _
    %v12 = vld [vmem:[%s1] sm:$0xff]
    %v13 = vld [vmem:[%s1 + $0x8] sm:$0xff]
    %s14 = scalar_lea.vmem %s1, 16
    %v15 = vld [vmem:[%s14] sm:$0xff]
    %v16 = vld [vmem:[%s14 + $0x8] sm:$0xff]
    %v17 = vld [vmem:[%s0] ss:$2 sm:$0x3]
    %s18 = scalar_lea.vmem %s0, 1
    %v19 = vld [vmem:[%s18] ss:$2 sm:$0x3]
    %v21 = vlaneseq
    %v22 = vshrl.u32 %v21, 7
    %v23 = vsub.s32 0, %v22
    %v24 = vrot.slane %v17, %v23
    %v25 = vlaneseq
    %v26 = vshrl.u32 %v25, 7
    %v27 = vsub.s32 1, %v26
    %v28 = vrot.slane %v17, %v27
    %32 = vset.pattern.permute.xlu0 0
    %33 = vperm.xlu0 %32, %v12
    %v34 = vpop.permute.xlu0 %33
    %37 = vset.pattern.permute.xlu0 0
    %38 = vperm.xlu0 %37, %v13
    %v39 = vpop.permute.xlu0 %38
    %v41 = vmul.f32 %v24, %v34
    %v42 = vmul.f32 %v28, %v34
    %v43 = vmul.f32 %v24, %v39
    %v44 = vmul.f32 %v28, %v39
    %46 = vset.pattern.permute.xlu0 0
    %47 = vperm.xlu0 %46, %v15
    %v48 = vpop.permute.xlu0 %47
    %51 = vset.pattern.permute.xlu0 0
    %52 = vperm.xlu0 %51, %v16
    %v53 = vpop.permute.xlu0 %52
    %v55 = vadd.f32 %v41, %v48
    %v56 = vadd.f32 %v42, %v48
    %v57 = vadd.f32 %v43, %v53
    %v58 = vadd.f32 %v44, %v53
    %v59 = vand.u32 2147483647, %v55
    %vm60 = vcmp.le.f32.partialorder %v59, 0.7853982
    %vm61 = vcmp.lt.s32.totalorder %v55, 0
    %v62 = vand.u32 %v55, 2139095040
    %v63 = vshrl.u32 %v62, 23
    %v64 = vsub.s32 %v63, 127
    %v65 = vand.u32 2147483647, %v55
    %v66 = vand.u32 %v65, 8388607
    %v67 = vor.u32 %v66, 8388608
    %v68 = vsub.s32 0, %v67
    %v69 = vadd.s32 %v64, 1
    %vm70 = vcmp.gt.s32.totalorder %v69, 0
    %v71 = vsel %vm70, %v69, 0
    %v72 = vshrl.u32 %v71, 5
    %v73 = vand.u32 %v71, 31
    %v74 = vsub.s32 32, %v73
    %v75 = vshrl.u32 683565275, %v74
    %v76 = vshll.u32 683565275, %v73
    %v77 = vshrl.u32 2475754826, %v74
    %v78 = vor.u32 %v76, %v77
    %v79 = vshll.u32 2475754826, %v73
    %v80 = vshrl.u32 2131351028, %v74
    %v81 = vor.u32 %v79, %v80
    %v82 = vshll.u32 2131351028, %v73
    %v83 = vshrl.u32 2102212464, %v74
    %v84 = vor.u32 %v82, %v83
    %v85 = vshll.u32 2102212464, %v73
    %v86 = vshrl.u32 920167782, %v74
    %v87 = vor.u32 %v85, %v86
    %v88 = vshll.u32 920167782, %v73
    %v89 = vshrl.u32 1326507024, %v74
    %v90 = vor.u32 %v88, %v89
    %vm91 = vcmp.lt.s32.totalorder %v72, 1
    %vm92 = vcmp.lt.s32.totalorder %v72, 2
    %vm93 = vcmp.lt.s32.totalorder %v72, 3
    %vm94 = vcmp.lt.s32.totalorder %v72, 4
    %v95 = vsel %vm91, %v75, %v78
    %v96 = vsel %vm94, %v84, 2102212464
    %v97 = vsel %vm93, %v81, %v96
    %v98 = vsel %vm92, %v95, %v97
    %v99 = vsel %vm91, %v78, %v81
    %v100 = vsel %vm94, %v87, 920167782
    %v101 = vsel %vm93, %v84, %v100
    %v102 = vsel %vm92, %v99, %v101
    %v103 = vsel %vm91, %v81, %v84
    %v104 = vsel %vm94, %v90, 1326507024
    %v105 = vsel %vm93, %v87, %v104
    %v106 = vsel %vm92, %v103, %v105
    %v107 = vshll.u32 %v67, 8
    %v108 = vmul.u32.u64.compose %v107, %v106
    %v109 = vextract.low.u32 %v108
    %v110 = vextract.high.u32 %v108
    %v111 = vmul.u32.u64.compose %v107, %v102
    %v112 = vextract.low.u32 %v111
    %v113 = vextract.high.u32 %v111
    %v114 = vmul.u32 %v107, %v98
    %v115 = vadd.s32 %v110, %v112
    %vm116 = vc.u32 %v110, %v112
    %v117 = vadd.s32 %v113, 1
    %v118 = vsel %vm116, %v117, %v113
    %v119 = vadd.s32 %v114, %v118
    %v120 = vadd.s32 %v119, 536870912
    %v121 = vshrl.u32 %v120, 30
    %v122 = vshll.u32 %v121, 30
    %v123 = vsub.s32 %v119, %v122
    %vm124 = vcmp.lt.s32.totalorder %v123, 0
    %v125 = vsub.s32 0, %v123
    %v126 = vsel %vm124, %v125, %v123
    %v127 = vclz %v126
    %v128 = vsub.s32 %v127, 2
    %vm129 = vcmp.gt.s32.totalorder 0, %v128
    %v130 = vsel %vm129, 0, %v128
    %v131 = vsub.s32 32, %v130
    %v132 = vshll.u32 %v123, %v130
    %v133 = vshrl.u32 %v115, %v131
    %v134 = vor.u32 %v132, %v133
    %v135 = vsub.s32 4294967266, %v130
    %v136 = vadd.s32 %v135, 127
    %v137 = vshll.u32 %v136, 23
    %v138 = vor.u32 4788187, %v137
    %v139 = vand.u32 2147483647, %v138
    %v141 = vcvt.s32.f32 %v134
    %v142 = vmul.f32 %v141, %v139
    %v143 = vxor.u32 %v142, 2147483648
    %v144 = vsel %vm61, %v143, %v142
    %v145 = vsub.s32 4, %v121
    %v146 = vsel %vm61, %v145, %v121
    %v147 = vsel %vm60, %v55, %v144
    %v148 = vsel %vm60, 0, %v146
    %v149 = vcosq.f32.pop %v147
    %v150 = vsinq.f32.pop %v147
    %vm151 = vweird.f32 %v55
    %v152 = vadd.s32 %v148, 3
    %v153 = vand.u32 %v152, 3
    %vm154 = vcmp.lt.s32.totalorder %v153, 2
    %vm155 = vcmp.eq.s32.totalorder %v153, 0
    %v156 = vxor.u32 %v150, 2147483648
    %v157 = vsel %vm155, %v149, %v156
    %vm158 = vcmp.eq.s32.totalorder %v153, 2
    %v159 = vxor.u32 %v149, 2147483648
    %v160 = vsel %vm158, %v159, %v150
    %v161 = vsel %vm154, %v157, %v160
    %v162 = vsel %vm151, nan, %v161
    %v163 = vand.u32 2147483647, %v56
    %vm164 = vcmp.le.f32.partialorder %v163, 0.7853982
    %vm165 = vcmp.lt.s32.totalorder %v56, 0
    %v166 = vand.u32 %v56, 2139095040
    %v167 = vshrl.u32 %v166, 23
    %v168 = vsub.s32 %v167, 127
    %v169 = vand.u32 2147483647, %v56
    %v170 = vand.u32 %v169, 8388607
    %v171 = vor.u32 %v170, 8388608
    %v172 = vsub.s32 0, %v171
    %v173 = vadd.s32 %v168, 1
    %vm174 = vcmp.gt.s32.totalorder %v173, 0
    %v175 = vsel %vm174, %v173, 0
    %v176 = vshrl.u32 %v175, 5
    %v177 = vand.u32 %v175, 31
    %v178 = vsub.s32 32, %v177
    %v179 = vshrl.u32 683565275, %v178
    %v180 = vshll.u32 683565275, %v177
    %v181 = vshrl.u32 2475754826, %v178
    %v182 = vor.u32 %v180, %v181
    %v183 = vshll.u32 2475754826, %v177
    %v184 = vshrl.u32 2131351028, %v178
    %v185 = vor.u32 %v183, %v184
    %v186 = vshll.u32 2131351028, %v177
    %v187 = vshrl.u32 2102212464, %v178
    %v188 = vor.u32 %v186, %v187
    %v189 = vshll.u32 2102212464, %v177
    %v190 = vshrl.u32 920167782, %v178
    %v191 = vor.u32 %v189, %v190
    %v192 = vshll.u32 920167782, %v177
    %v193 = vshrl.u32 1326507024, %v178
    %v194 = vor.u32 %v192, %v193
    %vm195 = vcmp.lt.s32.totalorder %v176, 1
    %vm196 = vcmp.lt.s32.totalorder %v176, 2
    %vm197 = vcmp.lt.s32.totalorder %v176, 3
    %vm198 = vcmp.lt.s32.totalorder %v176, 4
    %v199 = vsel %vm195, %v179, %v182
    %v200 = vsel %vm198, %v188, 2102212464
    %v201 = vsel %vm197, %v185, %v200
    %v202 = vsel %vm196, %v199, %v201
    %v203 = vsel %vm195, %v182, %v185
    %v204 = vsel %vm198, %v191, 920167782
    %v205 = vsel %vm197, %v188, %v204
    %v206 = vsel %vm196, %v203, %v205
    %v207 = vsel %vm195, %v185, %v188
    %v208 = vsel %vm198, %v194, 1326507024
    %v209 = vsel %vm197, %v191, %v208
    %v210 = vsel %vm196, %v207, %v209
    %v211 = vshll.u32 %v171, 8
    %v212 = vmul.u32.u64.compose %v211, %v210
    %v213 = vextract.low.u32 %v212
    %v214 = vextract.high.u32 %v212
    %v215 = vmul.u32.u64.compose %v211, %v206
    %v216 = vextract.low.u32 %v215
    %v217 = vextract.high.u32 %v215
    %v218 = vmul.u32 %v211, %v202
    %v219 = vadd.s32 %v214, %v216
    %vm220 = vc.u32 %v214, %v216
    %v221 = vadd.s32 %v217, 1
    %v222 = vsel %vm220, %v221, %v217
    %v223 = vadd.s32 %v218, %v222
    %v224 = vadd.s32 %v223, 536870912
    %v225 = vshrl.u32 %v224, 30
    %v226 = vshll.u32 %v225, 30
    %v227 = vsub.s32 %v223, %v226
    %vm228 = vcmp.lt.s32.totalorder %v227, 0
    %v229 = vsub.s32 0, %v227
    %v230 = vsel %vm228, %v229, %v227
    %v231 = vclz %v230
    %v232 = vsub.s32 %v231, 2
    %vm233 = vcmp.gt.s32.totalorder 0, %v232
    %v234 = vsel %vm233, 0, %v232
    %v235 = vsub.s32 32, %v234
    %v236 = vshll.u32 %v227, %v234
    %v237 = vshrl.u32 %v219, %v235
    %v238 = vor.u32 %v236, %v237
    %v239 = vsub.s32 4294967266, %v234
    %v240 = vadd.s32 %v239, 127
    %v241 = vshll.u32 %v240, 23
    %v242 = vor.u32 4788187, %v241
    %v243 = vand.u32 2147483647, %v242
    %v245 = vcvt.s32.f32 %v238
    %v246 = vmul.f32 %v245, %v243
    %v247 = vxor.u32 %v246, 2147483648
    %v248 = vsel %vm165, %v247, %v246
    %v249 = vsub.s32 4, %v225
    %v250 = vsel %vm165, %v249, %v225
    %v251 = vsel %vm164, %v56, %v248
    %v252 = vsel %vm164, 0, %v250
    %v253 = vcosq.f32.pop %v251
    %v254 = vsinq.f32.pop %v251
    %vm255 = vweird.f32 %v56
    %v256 = vadd.s32 %v252, 3
    %v257 = vand.u32 %v256, 3
    %vm258 = vcmp.lt.s32.totalorder %v257, 2
    %vm259 = vcmp.eq.s32.totalorder %v257, 0
    %v260 = vxor.u32 %v254, 2147483648
    %v261 = vsel %vm259, %v253, %v260
    %vm262 = vcmp.eq.s32.totalorder %v257, 2
    %v263 = vxor.u32 %v253, 2147483648
    %v264 = vsel %vm262, %v263, %v254
    %v265 = vsel %vm258, %v261, %v264
    %v266 = vsel %vm255, nan, %v265
    %v267 = vand.u32 2147483647, %v57
    %vm268 = vcmp.le.f32.partialorder %v267, 0.7853982
    %vm269 = vcmp.lt.s32.totalorder %v57, 0
    %v270 = vand.u32 %v57, 2139095040
    %v271 = vshrl.u32 %v270, 23
    %v272 = vsub.s32 %v271, 127
    %v273 = vand.u32 2147483647, %v57
    %v274 = vand.u32 %v273, 8388607
    %v275 = vor.u32 %v274, 8388608
    %v276 = vsub.s32 0, %v275
    %v277 = vadd.s32 %v272, 1
    %vm278 = vcmp.gt.s32.totalorder %v277, 0
    %v279 = vsel %vm278, %v277, 0
    %v280 = vshrl.u32 %v279, 5
    %v281 = vand.u32 %v279, 31
    %v282 = vsub.s32 32, %v281
    %v283 = vshrl.u32 683565275, %v282
    %v284 = vshll.u32 683565275, %v281
    %v285 = vshrl.u32 2475754826, %v282
    %v286 = vor.u32 %v284, %v285
    %v287 = vshll.u32 2475754826, %v281
    %v288 = vshrl.u32 2131351028, %v282
    %v289 = vor.u32 %v287, %v288
    %v290 = vshll.u32 2131351028, %v281
    %v291 = vshrl.u32 2102212464, %v282
    %v292 = vor.u32 %v290, %v291
    %v293 = vshll.u32 2102212464, %v281
    %v294 = vshrl.u32 920167782, %v282
    %v295 = vor.u32 %v293, %v294
    %v296 = vshll.u32 920167782, %v281
    %v297 = vshrl.u32 1326507024, %v282
    %v298 = vor.u32 %v296, %v297
    %vm299 = vcmp.lt.s32.totalorder %v280, 1
    %vm300 = vcmp.lt.s32.totalorder %v280, 2
    %vm301 = vcmp.lt.s32.totalorder %v280, 3
    %vm302 = vcmp.lt.s32.totalorder %v280, 4
    %v303 = vsel %vm299, %v283, %v286
    %v304 = vsel %vm302, %v292, 2102212464
    %v305 = vsel %vm301, %v289, %v304
    %v306 = vsel %vm300, %v303, %v305
    %v307 = vsel %vm299, %v286, %v289
    %v308 = vsel %vm302, %v295, 920167782
    %v309 = vsel %vm301, %v292, %v308
    %v310 = vsel %vm300, %v307, %v309
    %v311 = vsel %vm299, %v289, %v292
    %v312 = vsel %vm302, %v298, 1326507024
    %v313 = vsel %vm301, %v295, %v312
    %v314 = vsel %vm300, %v311, %v313
    %v315 = vshll.u32 %v275, 8
    %v316 = vmul.u32.u64.compose %v315, %v314
    %v317 = vextract.low.u32 %v316
    %v318 = vextract.high.u32 %v316
    %v319 = vmul.u32.u64.compose %v315, %v310
    %v320 = vextract.low.u32 %v319
    %v321 = vextract.high.u32 %v319
    %v322 = vmul.u32 %v315, %v306
    %v323 = vadd.s32 %v318, %v320
    %vm324 = vc.u32 %v318, %v320
    %v325 = vadd.s32 %v321, 1
    %v326 = vsel %vm324, %v325, %v321
    %v327 = vadd.s32 %v322, %v326
    %v328 = vadd.s32 %v327, 536870912
    %v329 = vshrl.u32 %v328, 30
    %v330 = vshll.u32 %v329, 30
    %v331 = vsub.s32 %v327, %v330
    %vm332 = vcmp.lt.s32.totalorder %v331, 0
    %v333 = vsub.s32 0, %v331
    %v334 = vsel %vm332, %v333, %v331
    %v335 = vclz %v334
    %v336 = vsub.s32 %v335, 2
    %vm337 = vcmp.gt.s32.totalorder 0, %v336
    %v338 = vsel %vm337, 0, %v336
    %v339 = vsub.s32 32, %v338
    %v340 = vshll.u32 %v331, %v338
    %v341 = vshrl.u32 %v323, %v339
    %v342 = vor.u32 %v340, %v341
    %v343 = vsub.s32 4294967266, %v338
    %v344 = vadd.s32 %v343, 127
    %v345 = vshll.u32 %v344, 23
    %v346 = vor.u32 4788187, %v345
    %v347 = vand.u32 2147483647, %v346
    %v349 = vcvt.s32.f32 %v342
    %v350 = vmul.f32 %v349, %v347
    %v351 = vxor.u32 %v350, 2147483648
    %v352 = vsel %vm269, %v351, %v350
    %v353 = vsub.s32 4, %v329
    %v354 = vsel %vm269, %v353, %v329
    %v355 = vsel %vm268, %v57, %v352
    %v356 = vsel %vm268, 0, %v354
    %v357 = vcosq.f32.pop %v355
    %v358 = vsinq.f32.pop %v355
    %vm359 = vweird.f32 %v57
    %v360 = vadd.s32 %v356, 3
    %v361 = vand.u32 %v360, 3
    %vm362 = vcmp.lt.s32.totalorder %v361, 2
    %vm363 = vcmp.eq.s32.totalorder %v361, 0
    %v364 = vxor.u32 %v358, 2147483648
    %v365 = vsel %vm363, %v357, %v364
    %vm366 = vcmp.eq.s32.totalorder %v361, 2
    %v367 = vxor.u32 %v357, 2147483648
    %v368 = vsel %vm366, %v367, %v358
    %v369 = vsel %vm362, %v365, %v368
    %v370 = vsel %vm359, nan, %v369
    %v371 = vand.u32 2147483647, %v58
    %vm372 = vcmp.le.f32.partialorder %v371, 0.7853982
    %vm373 = vcmp.lt.s32.totalorder %v58, 0
    %v374 = vand.u32 %v58, 2139095040
    %v375 = vshrl.u32 %v374, 23
    %v376 = vsub.s32 %v375, 127
    %v377 = vand.u32 2147483647, %v58
    %v378 = vand.u32 %v377, 8388607
    %v379 = vor.u32 %v378, 8388608
    %v380 = vsub.s32 0, %v379
    %v381 = vadd.s32 %v376, 1
    %vm382 = vcmp.gt.s32.totalorder %v381, 0
    %v383 = vsel %vm382, %v381, 0
    %v384 = vshrl.u32 %v383, 5
    %v385 = vand.u32 %v383, 31
    %v386 = vsub.s32 32, %v385
    %v387 = vshrl.u32 683565275, %v386
    %v388 = vshll.u32 683565275, %v385
    %v389 = vshrl.u32 2475754826, %v386
    %v390 = vor.u32 %v388, %v389
    %v391 = vshll.u32 2475754826, %v385
    %v392 = vshrl.u32 2131351028, %v386
    %v393 = vor.u32 %v391, %v392
    %v394 = vshll.u32 2131351028, %v385
    %v395 = vshrl.u32 2102212464, %v386
    %v396 = vor.u32 %v394, %v395
    %v397 = vshll.u32 2102212464, %v385
    %v398 = vshrl.u32 920167782, %v386
    %v399 = vor.u32 %v397, %v398
    %v400 = vshll.u32 920167782, %v385
    %v401 = vshrl.u32 1326507024, %v386
    %v402 = vor.u32 %v400, %v401
    %vm403 = vcmp.lt.s32.totalorder %v384, 1
    %vm404 = vcmp.lt.s32.totalorder %v384, 2
    %vm405 = vcmp.lt.s32.totalorder %v384, 3
    %vm406 = vcmp.lt.s32.totalorder %v384, 4
    %v407 = vsel %vm403, %v387, %v390
    %v408 = vsel %vm406, %v396, 2102212464
    %v409 = vsel %vm405, %v393, %v408
    %v410 = vsel %vm404, %v407, %v409
    %v411 = vsel %vm403, %v390, %v393
    %v412 = vsel %vm406, %v399, 920167782
    %v413 = vsel %vm405, %v396, %v412
    %v414 = vsel %vm404, %v411, %v413
    %v415 = vsel %vm403, %v393, %v396
    %v416 = vsel %vm406, %v402, 1326507024
    %v417 = vsel %vm405, %v399, %v416
    %v418 = vsel %vm404, %v415, %v417
    %v419 = vshll.u32 %v379, 8
    %v420 = vmul.u32.u64.compose %v419, %v418
    %v421 = vextract.low.u32 %v420
    %v422 = vextract.high.u32 %v420
    %v423 = vmul.u32.u64.compose %v419, %v414
    %v424 = vextract.low.u32 %v423
    %v425 = vextract.high.u32 %v423
    %v426 = vmul.u32 %v419, %v410
    %v427 = vadd.s32 %v422, %v424
    %vm428 = vc.u32 %v422, %v424
    %v429 = vadd.s32 %v425, 1
    %v430 = vsel %vm428, %v429, %v425
    %v431 = vadd.s32 %v426, %v430
    %v432 = vadd.s32 %v431, 536870912
    %v433 = vshrl.u32 %v432, 30
    %v434 = vshll.u32 %v433, 30
    %v435 = vsub.s32 %v431, %v434
    %vm436 = vcmp.lt.s32.totalorder %v435, 0
    %v437 = vsub.s32 0, %v435
    %v438 = vsel %vm436, %v437, %v435
    %v439 = vclz %v438
    %v440 = vsub.s32 %v439, 2
    %vm441 = vcmp.gt.s32.totalorder 0, %v440
    %v442 = vsel %vm441, 0, %v440
    %v443 = vsub.s32 32, %v442
    %v444 = vshll.u32 %v435, %v442
    %v445 = vshrl.u32 %v427, %v443
    %v446 = vor.u32 %v444, %v445
    %v447 = vsub.s32 4294967266, %v442
    %v448 = vadd.s32 %v447, 127
    %v449 = vshll.u32 %v448, 23
    %v450 = vor.u32 4788187, %v449
    %v451 = vand.u32 2147483647, %v450
    %v453 = vcvt.s32.f32 %v446
    %v454 = vmul.f32 %v453, %v451
    %v455 = vxor.u32 %v454, 2147483648
    %v456 = vsel %vm373, %v455, %v454
    %v457 = vsub.s32 4, %v433
    %v458 = vsel %vm373, %v457, %v433
    %v459 = vsel %vm372, %v58, %v456
    %v460 = vsel %vm372, 0, %v458
    %v461 = vcosq.f32.pop %v459
    %v462 = vsinq.f32.pop %v459
    %vm463 = vweird.f32 %v58
    %v464 = vadd.s32 %v460, 3
    %v465 = vand.u32 %v464, 3
    %vm466 = vcmp.lt.s32.totalorder %v465, 2
    %vm467 = vcmp.eq.s32.totalorder %v465, 0
    %v468 = vxor.u32 %v462, 2147483648
    %v469 = vsel %vm467, %v461, %v468
    %vm470 = vcmp.eq.s32.totalorder %v465, 2
    %v471 = vxor.u32 %v461, 2147483648
    %v472 = vsel %vm470, %v471, %v462
    %v473 = vsel %vm466, %v469, %v472
    %v474 = vsel %vm463, nan, %v473
    %475 = vst [vmem:[#allocation2] sm:$0xff] %v162
    %476 = vst [vmem:[#allocation2 + $0x8] sm:$0xff] %v266
    %477 = vst [vmem:[#allocation2 + $0x10] sm:$0xff] %v370
    %478 = vst [vmem:[#allocation2 + $0x18] sm:$0xff] %v474
    %v480 = vlaneseq
    %v481 = vshrl.u32 %v480, 7
    %v482 = vsub.s32 0, %v481
    %v483 = vrot.slane %v19, %v482
    %v484 = vlaneseq
    %v485 = vshrl.u32 %v484, 7
    %v486 = vsub.s32 1, %v485
    %v487 = vrot.slane %v19, %v486
    %v490 = vmul.f32 %v483, %v34
    %v491 = vmul.f32 %v487, %v34
    %v492 = vmul.f32 %v483, %v39
    %v493 = vmul.f32 %v487, %v39
    %v494 = vadd.f32 %v490, %v48
    %v495 = vadd.f32 %v491, %v48
    %v496 = vadd.f32 %v492, %v53
    %v497 = vadd.f32 %v493, %v53
    %v498 = vand.u32 2147483647, %v494
    %vm499 = vcmp.le.f32.partialorder %v498, 0.7853982
    %vm500 = vcmp.lt.s32.totalorder %v494, 0
    %v501 = vand.u32 %v494, 2139095040
    %v502 = vshrl.u32 %v501, 23
    %v503 = vsub.s32 %v502, 127
    %v504 = vand.u32 2147483647, %v494
    %v505 = vand.u32 %v504, 8388607
    %v506 = vor.u32 %v505, 8388608
    %v507 = vsub.s32 0, %v506
    %v508 = vadd.s32 %v503, 1
    %vm509 = vcmp.gt.s32.totalorder %v508, 0
    %v510 = vsel %vm509, %v508, 0
    %v511 = vshrl.u32 %v510, 5
    %v512 = vand.u32 %v510, 31
    %v513 = vsub.s32 32, %v512
    %v514 = vshrl.u32 683565275, %v513
    %v515 = vshll.u32 683565275, %v512
    %v516 = vshrl.u32 2475754826, %v513
    %v517 = vor.u32 %v515, %v516
    %v518 = vshll.u32 2475754826, %v512
    %v519 = vshrl.u32 2131351028, %v513
    %v520 = vor.u32 %v518, %v519
    %v521 = vshll.u32 2131351028, %v512
    %v522 = vshrl.u32 2102212464, %v513
    %v523 = vor.u32 %v521, %v522
    %v524 = vshll.u32 2102212464, %v512
    %v525 = vshrl.u32 920167782, %v513
    %v526 = vor.u32 %v524, %v525
    %v527 = vshll.u32 920167782, %v512
    %v528 = vshrl.u32 1326507024, %v513
    %v529 = vor.u32 %v527, %v528
    %vm530 = vcmp.lt.s32.totalorder %v511, 1
    %vm531 = vcmp.lt.s32.totalorder %v511, 2
    %vm532 = vcmp.lt.s32.totalorder %v511, 3
    %vm533 = vcmp.lt.s32.totalorder %v511, 4
    %v534 = vsel %vm530, %v514, %v517
    %v535 = vsel %vm533, %v523, 2102212464
    %v536 = vsel %vm532, %v520, %v535
    %v537 = vsel %vm531, %v534, %v536
    %v538 = vsel %vm530, %v517, %v520
    %v539 = vsel %vm533, %v526, 920167782
    %v540 = vsel %vm532, %v523, %v539
    %v541 = vsel %vm531, %v538, %v540
    %v542 = vsel %vm530, %v520, %v523
    %v543 = vsel %vm533, %v529, 1326507024
    %v544 = vsel %vm532, %v526, %v543
    %v545 = vsel %vm531, %v542, %v544
    %v546 = vshll.u32 %v506, 8
    %v547 = vmul.u32.u64.compose %v546, %v545
    %v548 = vextract.low.u32 %v547
    %v549 = vextract.high.u32 %v547
    %v550 = vmul.u32.u64.compose %v546, %v541
    %v551 = vextract.low.u32 %v550
    %v552 = vextract.high.u32 %v550
    %v553 = vmul.u32 %v546, %v537
    %v554 = vadd.s32 %v549, %v551
    %vm555 = vc.u32 %v549, %v551
    %v556 = vadd.s32 %v552, 1
    %v557 = vsel %vm555, %v556, %v552
    %v558 = vadd.s32 %v553, %v557
    %v559 = vadd.s32 %v558, 536870912
    %v560 = vshrl.u32 %v559, 30
    %v561 = vshll.u32 %v560, 30
    %v562 = vsub.s32 %v558, %v561
    %vm563 = vcmp.lt.s32.totalorder %v562, 0
    %v564 = vsub.s32 0, %v562
    %v565 = vsel %vm563, %v564, %v562
    %v566 = vclz %v565
    %v567 = vsub.s32 %v566, 2
    %vm568 = vcmp.gt.s32.totalorder 0, %v567
    %v569 = vsel %vm568, 0, %v567
    %v570 = vsub.s32 32, %v569
    %v571 = vshll.u32 %v562, %v569
    %v572 = vshrl.u32 %v554, %v570
    %v573 = vor.u32 %v571, %v572
    %v574 = vsub.s32 4294967266, %v569
    %v575 = vadd.s32 %v574, 127
    %v576 = vshll.u32 %v575, 23
    %v577 = vor.u32 4788187, %v576
    %v578 = vand.u32 2147483647, %v577
    %v580 = vcvt.s32.f32 %v573
    %v581 = vmul.f32 %v580, %v578
    %v582 = vxor.u32 %v581, 2147483648
    %v583 = vsel %vm500, %v582, %v581
    %v584 = vsub.s32 4, %v560
    %v585 = vsel %vm500, %v584, %v560
    %v586 = vsel %vm499, %v494, %v583
    %v587 = vsel %vm499, 0, %v585
    %v588 = vcosq.f32.pop %v586
    %v589 = vsinq.f32.pop %v586
    %vm590 = vweird.f32 %v494
    %v591 = vadd.s32 %v587, 3
    %v592 = vand.u32 %v591, 3
    %vm593 = vcmp.lt.s32.totalorder %v592, 2
    %vm594 = vcmp.eq.s32.totalorder %v592, 0
    %v595 = vxor.u32 %v589, 2147483648
    %v596 = vsel %vm594, %v588, %v595
    %vm597 = vcmp.eq.s32.totalorder %v592, 2
    %v598 = vxor.u32 %v588, 2147483648
    %v599 = vsel %vm597, %v598, %v589
    %v600 = vsel %vm593, %v596, %v599
    %v601 = vsel %vm590, nan, %v600
    %v602 = vand.u32 2147483647, %v495
    %vm603 = vcmp.le.f32.partialorder %v602, 0.7853982
    %vm604 = vcmp.lt.s32.totalorder %v495, 0
    %v605 = vand.u32 %v495, 2139095040
    %v606 = vshrl.u32 %v605, 23
    %v607 = vsub.s32 %v606, 127
    %v608 = vand.u32 2147483647, %v495
    %v609 = vand.u32 %v608, 8388607
    %v610 = vor.u32 %v609, 8388608
    %v611 = vsub.s32 0, %v610
    %v612 = vadd.s32 %v607, 1
    %vm613 = vcmp.gt.s32.totalorder %v612, 0
    %v614 = vsel %vm613, %v612, 0
    %v615 = vshrl.u32 %v614, 5
    %v616 = vand.u32 %v614, 31
    %v617 = vsub.s32 32, %v616
    %v618 = vshrl.u32 683565275, %v617
    %v619 = vshll.u32 683565275, %v616
    %v620 = vshrl.u32 2475754826, %v617
    %v621 = vor.u32 %v619, %v620
    %v622 = vshll.u32 2475754826, %v616
    %v623 = vshrl.u32 2131351028, %v617
    %v624 = vor.u32 %v622, %v623
    %v625 = vshll.u32 2131351028, %v616
    %v626 = vshrl.u32 2102212464, %v617
    %v627 = vor.u32 %v625, %v626
    %v628 = vshll.u32 2102212464, %v616
    %v629 = vshrl.u32 920167782, %v617
    %v630 = vor.u32 %v628, %v629
    %v631 = vshll.u32 920167782, %v616
    %v632 = vshrl.u32 1326507024, %v617
    %v633 = vor.u32 %v631, %v632
    %vm634 = vcmp.lt.s32.totalorder %v615, 1
    %vm635 = vcmp.lt.s32.totalorder %v615, 2
    %vm636 = vcmp.lt.s32.totalorder %v615, 3
    %vm637 = vcmp.lt.s32.totalorder %v615, 4
    %v638 = vsel %vm634, %v618, %v621
    %v639 = vsel %vm637, %v627, 2102212464
    %v640 = vsel %vm636, %v624, %v639
    %v641 = vsel %vm635, %v638, %v640
    %v642 = vsel %vm634, %v621, %v624
    %v643 = vsel %vm637, %v630, 920167782
    %v644 = vsel %vm636, %v627, %v643
    %v645 = vsel %vm635, %v642, %v644
    %v646 = vsel %vm634, %v624, %v627
    %v647 = vsel %vm637, %v633, 1326507024
    %v648 = vsel %vm636, %v630, %v647
    %v649 = vsel %vm635, %v646, %v648
    %v650 = vshll.u32 %v610, 8
    %v651 = vmul.u32.u64.compose %v650, %v649
    %v652 = vextract.low.u32 %v651
    %v653 = vextract.high.u32 %v651
    %v654 = vmul.u32.u64.compose %v650, %v645
    %v655 = vextract.low.u32 %v654
    %v656 = vextract.high.u32 %v654
    %v657 = vmul.u32 %v650, %v641
    %v658 = vadd.s32 %v653, %v655
    %vm659 = vc.u32 %v653, %v655
    %v660 = vadd.s32 %v656, 1
    %v661 = vsel %vm659, %v660, %v656
    %v662 = vadd.s32 %v657, %v661
    %v663 = vadd.s32 %v662, 536870912
    %v664 = vshrl.u32 %v663, 30
    %v665 = vshll.u32 %v664, 30
    %v666 = vsub.s32 %v662, %v665
    %vm667 = vcmp.lt.s32.totalorder %v666, 0
    %v668 = vsub.s32 0, %v666
    %v669 = vsel %vm667, %v668, %v666
    %v670 = vclz %v669
    %v671 = vsub.s32 %v670, 2
    %vm672 = vcmp.gt.s32.totalorder 0, %v671
    %v673 = vsel %vm672, 0, %v671
    %v674 = vsub.s32 32, %v673
    %v675 = vshll.u32 %v666, %v673
    %v676 = vshrl.u32 %v658, %v674
    %v677 = vor.u32 %v675, %v676
    %v678 = vsub.s32 4294967266, %v673
    %v679 = vadd.s32 %v678, 127
    %v680 = vshll.u32 %v679, 23
    %v681 = vor.u32 4788187, %v680
    %v682 = vand.u32 2147483647, %v681
    %v684 = vcvt.s32.f32 %v677
    %v685 = vmul.f32 %v684, %v682
    %v686 = vxor.u32 %v685, 2147483648
    %v687 = vsel %vm604, %v686, %v685
    %v688 = vsub.s32 4, %v664
    %v689 = vsel %vm604, %v688, %v664
    %v690 = vsel %vm603, %v495, %v687
    %v691 = vsel %vm603, 0, %v689
    %v692 = vcosq.f32.pop %v690
    %v693 = vsinq.f32.pop %v690
    %vm694 = vweird.f32 %v495
    %v695 = vadd.s32 %v691, 3
    %v696 = vand.u32 %v695, 3
    %vm697 = vcmp.lt.s32.totalorder %v696, 2
    %vm698 = vcmp.eq.s32.totalorder %v696, 0
    %v699 = vxor.u32 %v693, 2147483648
    %v700 = vsel %vm698, %v692, %v699
    %vm701 = vcmp.eq.s32.totalorder %v696, 2
    %v702 = vxor.u32 %v692, 2147483648
    %v703 = vsel %vm701, %v702, %v693
    %v704 = vsel %vm697, %v700, %v703
    %v705 = vsel %vm694, nan, %v704
    %v706 = vand.u32 2147483647, %v496
    %vm707 = vcmp.le.f32.partialorder %v706, 0.7853982
    %vm708 = vcmp.lt.s32.totalorder %v496, 0
    %v709 = vand.u32 %v496, 2139095040
    %v710 = vshrl.u32 %v709, 23
    %v711 = vsub.s32 %v710, 127
    %v712 = vand.u32 2147483647, %v496
    %v713 = vand.u32 %v712, 8388607
    %v714 = vor.u32 %v713, 8388608
    %v715 = vsub.s32 0, %v714
    %v716 = vadd.s32 %v711, 1
    %vm717 = vcmp.gt.s32.totalorder %v716, 0
    %v718 = vsel %vm717, %v716, 0
    %v719 = vshrl.u32 %v718, 5
    %v720 = vand.u32 %v718, 31
    %v721 = vsub.s32 32, %v720
    %v722 = vshrl.u32 683565275, %v721
    %v723 = vshll.u32 683565275, %v720
    %v724 = vshrl.u32 2475754826, %v721
    %v725 = vor.u32 %v723, %v724
    %v726 = vshll.u32 2475754826, %v720
    %v727 = vshrl.u32 2131351028, %v721
    %v728 = vor.u32 %v726, %v727
    %v729 = vshll.u32 2131351028, %v720
    %v730 = vshrl.u32 2102212464, %v721
    %v731 = vor.u32 %v729, %v730
    %v732 = vshll.u32 2102212464, %v720
    %v733 = vshrl.u32 920167782, %v721
    %v734 = vor.u32 %v732, %v733
    %v735 = vshll.u32 920167782, %v720
    %v736 = vshrl.u32 1326507024, %v721
    %v737 = vor.u32 %v735, %v736
    %vm738 = vcmp.lt.s32.totalorder %v719, 1
    %vm739 = vcmp.lt.s32.totalorder %v719, 2
    %vm740 = vcmp.lt.s32.totalorder %v719, 3
    %vm741 = vcmp.lt.s32.totalorder %v719, 4
    %v742 = vsel %vm738, %v722, %v725
    %v743 = vsel %vm741, %v731, 2102212464
    %v744 = vsel %vm740, %v728, %v743
    %v745 = vsel %vm739, %v742, %v744
    %v746 = vsel %vm738, %v725, %v728
    %v747 = vsel %vm741, %v734, 920167782
    %v748 = vsel %vm740, %v731, %v747
    %v749 = vsel %vm739, %v746, %v748
    %v750 = vsel %vm738, %v728, %v731
    %v751 = vsel %vm741, %v737, 1326507024
    %v752 = vsel %vm740, %v734, %v751
    %v753 = vsel %vm739, %v750, %v752
    %v754 = vshll.u32 %v714, 8
    %v755 = vmul.u32.u64.compose %v754, %v753
    %v756 = vextract.low.u32 %v755
    %v757 = vextract.high.u32 %v755
    %v758 = vmul.u32.u64.compose %v754, %v749
    %v759 = vextract.low.u32 %v758
    %v760 = vextract.high.u32 %v758
    %v761 = vmul.u32 %v754, %v745
    %v762 = vadd.s32 %v757, %v759
    %vm763 = vc.u32 %v757, %v759
    %v764 = vadd.s32 %v760, 1
    %v765 = vsel %vm763, %v764, %v760
    %v766 = vadd.s32 %v761, %v765
    %v767 = vadd.s32 %v766, 536870912
    %v768 = vshrl.u32 %v767, 30
    %v769 = vshll.u32 %v768, 30
    %v770 = vsub.s32 %v766, %v769
    %vm771 = vcmp.lt.s32.totalorder %v770, 0
    %v772 = vsub.s32 0, %v770
    %v773 = vsel %vm771, %v772, %v770
    %v774 = vclz %v773
    %v775 = vsub.s32 %v774, 2
    %vm776 = vcmp.gt.s32.totalorder 0, %v775
    %v777 = vsel %vm776, 0, %v775
    %v778 = vsub.s32 32, %v777
    %v779 = vshll.u32 %v770, %v777
    %v780 = vshrl.u32 %v762, %v778
    %v781 = vor.u32 %v779, %v780
    %v782 = vsub.s32 4294967266, %v777
    %v783 = vadd.s32 %v782, 127
    %v784 = vshll.u32 %v783, 23
    %v785 = vor.u32 4788187, %v784
    %v786 = vand.u32 2147483647, %v785
    %v788 = vcvt.s32.f32 %v781
    %v789 = vmul.f32 %v788, %v786
    %v790 = vxor.u32 %v789, 2147483648
    %v791 = vsel %vm708, %v790, %v789
    %v792 = vsub.s32 4, %v768
    %v793 = vsel %vm708, %v792, %v768
    %v794 = vsel %vm707, %v496, %v791
    %v795 = vsel %vm707, 0, %v793
    %v796 = vcosq.f32.pop %v794
    %v797 = vsinq.f32.pop %v794
    %vm798 = vweird.f32 %v496
    %v799 = vadd.s32 %v795, 3
    %v800 = vand.u32 %v799, 3
    %vm801 = vcmp.lt.s32.totalorder %v800, 2
    %vm802 = vcmp.eq.s32.totalorder %v800, 0
    %v803 = vxor.u32 %v797, 2147483648
    %v804 = vsel %vm802, %v796, %v803
    %vm805 = vcmp.eq.s32.totalorder %v800, 2
    %v806 = vxor.u32 %v796, 2147483648
    %v807 = vsel %vm805, %v806, %v797
    %v808 = vsel %vm801, %v804, %v807
    %v809 = vsel %vm798, nan, %v808
    %v810 = vand.u32 2147483647, %v497
    %vm811 = vcmp.le.f32.partialorder %v810, 0.7853982
    %vm812 = vcmp.lt.s32.totalorder %v497, 0
    %v813 = vand.u32 %v497, 2139095040
    %v814 = vshrl.u32 %v813, 23
    %v815 = vsub.s32 %v814, 127
    %v816 = vand.u32 2147483647, %v497
    %v817 = vand.u32 %v816, 8388607
    %v818 = vor.u32 %v817, 8388608
    %v819 = vsub.s32 0, %v818
    %v820 = vadd.s32 %v815, 1
    %vm821 = vcmp.gt.s32.totalorder %v820, 0
    %v822 = vsel %vm821, %v820, 0
    %v823 = vshrl.u32 %v822, 5
    %v824 = vand.u32 %v822, 31
    %v825 = vsub.s32 32, %v824
    %v826 = vshrl.u32 683565275, %v825
    %v827 = vshll.u32 683565275, %v824
    %v828 = vshrl.u32 2475754826, %v825
    %v829 = vor.u32 %v827, %v828
    %v830 = vshll.u32 2475754826, %v824
    %v831 = vshrl.u32 2131351028, %v825
    %v832 = vor.u32 %v830, %v831
    %v833 = vshll.u32 2131351028, %v824
    %v834 = vshrl.u32 2102212464, %v825
    %v835 = vor.u32 %v833, %v834
    %v836 = vshll.u32 2102212464, %v824
    %v837 = vshrl.u32 920167782, %v825
    %v838 = vor.u32 %v836, %v837
    %v839 = vshll.u32 920167782, %v824
    %v840 = vshrl.u32 1326507024, %v825
    %v841 = vor.u32 %v839, %v840
    %vm842 = vcmp.lt.s32.totalorder %v823, 1
    %vm843 = vcmp.lt.s32.totalorder %v823, 2
    %vm844 = vcmp.lt.s32.totalorder %v823, 3
    %vm845 = vcmp.lt.s32.totalorder %v823, 4
    %v846 = vsel %vm842, %v826, %v829
    %v847 = vsel %vm845, %v835, 2102212464
    %v848 = vsel %vm844, %v832, %v847
    %v849 = vsel %vm843, %v846, %v848
    %v850 = vsel %vm842, %v829, %v832
    %v851 = vsel %vm845, %v838, 920167782
    %v852 = vsel %vm844, %v835, %v851
    %v853 = vsel %vm843, %v850, %v852
    %v854 = vsel %vm842, %v832, %v835
    %v855 = vsel %vm845, %v841, 1326507024
    %v856 = vsel %vm844, %v838, %v855
    %v857 = vsel %vm843, %v854, %v856
    %v858 = vshll.u32 %v818, 8
    %v859 = vmul.u32.u64.compose %v858, %v857
    %v860 = vextract.low.u32 %v859
    %v861 = vextract.high.u32 %v859
    %v862 = vmul.u32.u64.compose %v858, %v853
    %v863 = vextract.low.u32 %v862
    %v864 = vextract.high.u32 %v862
    %v865 = vmul.u32 %v858, %v849
    %v866 = vadd.s32 %v861, %v863
    %vm867 = vc.u32 %v861, %v863
    %v868 = vadd.s32 %v864, 1
    %v869 = vsel %vm867, %v868, %v864
    %v870 = vadd.s32 %v865, %v869
    %v871 = vadd.s32 %v870, 536870912
    %v872 = vshrl.u32 %v871, 30
    %v873 = vshll.u32 %v872, 30
    %v874 = vsub.s32 %v870, %v873
    %vm875 = vcmp.lt.s32.totalorder %v874, 0
    %v876 = vsub.s32 0, %v874
    %v877 = vsel %vm875, %v876, %v874
    %v878 = vclz %v877
    %v879 = vsub.s32 %v878, 2
    %vm880 = vcmp.gt.s32.totalorder 0, %v879
    %v881 = vsel %vm880, 0, %v879
    %v882 = vsub.s32 32, %v881
    %v883 = vshll.u32 %v874, %v881
    %v884 = vshrl.u32 %v866, %v882
    %v885 = vor.u32 %v883, %v884
    %v886 = vsub.s32 4294967266, %v881
    %v887 = vadd.s32 %v886, 127
    %v888 = vshll.u32 %v887, 23
    %v889 = vor.u32 4788187, %v888
    %v890 = vand.u32 2147483647, %v889
    %v892 = vcvt.s32.f32 %v885
    %v893 = vmul.f32 %v892, %v890
    %v894 = vxor.u32 %v893, 2147483648
    %v895 = vsel %vm812, %v894, %v893
    %v896 = vsub.s32 4, %v872
    %v897 = vsel %vm812, %v896, %v872
    %v898 = vsel %vm811, %v497, %v895
    %v899 = vsel %vm811, 0, %v897
    %v900 = vcosq.f32.pop %v898
    %v901 = vsinq.f32.pop %v898
    %vm902 = vweird.f32 %v497
    %v903 = vadd.s32 %v899, 3
    %v904 = vand.u32 %v903, 3
    %vm905 = vcmp.lt.s32.totalorder %v904, 2
    %vm906 = vcmp.eq.s32.totalorder %v904, 0
    %v907 = vxor.u32 %v901, 2147483648
    %v908 = vsel %vm906, %v900, %v907
    %vm909 = vcmp.eq.s32.totalorder %v904, 2
    %v910 = vxor.u32 %v900, 2147483648
    %v911 = vsel %vm909, %v910, %v901
    %v912 = vsel %vm905, %v908, %v911
    %v913 = vsel %vm902, nan, %v912
    %s914 = scalar_lea.vmem [#allocation2], 32
    %915 = vst [vmem:[%s914] sm:$0xff] %v601
    %916 = vst [vmem:[%s914 + $0x8] sm:$0xff] %v705
    %917 = vst [vmem:[%s914 + $0x10] sm:$0xff] %v809
    %918 = vst [vmem:[%s914 + $0x18] sm:$0xff] %v913
    // Predicated region
    $region10: #{tpu_custom_call.1} parent=1 // pred_check
      _
    $region11: #{tpu_custom_call.1} parent=1 // pred_check_branch
      %920 = sbr.rel (0) target = $region13
    $region12: #{tpu_custom_call.1} parent=1 // pred_region
      %s922 = ssub.s32 1024, 1024
      %923 = vsyncadd [#allocation3], %s922
      %s924 = sshll.u32 [#allocation2], 4
      %s925 = int_to_ptr.vmem [resolvable:$true] %s924
      %930 = dma.vmem_to_hbm [thread:$0]  %s925, 1024, %s2, [#allocation3], 256, 256, 16
    $region13: #{tpu_custom_call.1} parent=1 // pred_fallthru
      _
    // Predicated region
    $region14: #{tpu_custom_call.1} parent=1 // pred_check
      _
    $region15: #{tpu_custom_call.1} parent=1 // pred_check_branch
      %932 = sbr.rel (0) target = $region17
    $region16: #{tpu_custom_call.1} parent=1 // pred_region
      %933 = dma.done [#allocation3], 1024
    $region17: #{tpu_custom_call.1} parent=1 // pred_fallthru
      _
    %934 = vsyncpa [#allocation3], 1

</llo_original>
